<compile_context>
chip_gen: v7x
topology: tpu7x:2x2x1
jax: 0.10.0
libtpu: 0.0.40
codegen_flags: <defaults>
</compile_context>

<pallas_src>
import functools

import jax
import jax.numpy as jnp
from jax.experimental import pallas as pl
from jax.experimental.pallas import tpu as pltpu


# ----------------------------- hardware queries ------------------------------


def _vmem_capacity_bytes():
    try:
        return int(pltpu.get_tpu_info().vmem_capacity_bytes)
    except Exception:
        return 64 * 1024 * 1024  # conservative fallback (v7x per-core VMEM)


def _chip_kind():
    try:
        return str(jax.devices()[0].device_kind).lower()
    except Exception:
        return ""


def _num_tensorcores():
    # v7x exposes 2 TensorCores per chip; v5e / v6e have 1.
    kind = _chip_kind()
    if "v7" in kind:
        return 2
    return 1


def _is_v5e():
    kind = _chip_kind()
    return ("v5 lite" in kind) or ("v5e" in kind) or ("v5litepod" in kind)


def _sublane_granularity(dtype):
    itemsize = jnp.dtype(dtype).itemsize
    if itemsize >= 4:
        return 8
    if itemsize == 2:
        return 16
    return 32


# --------------------------------- tiling ------------------------------------


def _pick_row_tile(rows, cols, in_dtype, compute_dtype, budget_bytes, granularity,
                   dual_tc):
    """Largest row tile fitting the VMEM budget; split 2-way only on dual-TC chips."""
    in_b = jnp.dtype(in_dtype).itemsize
    cd_b = jnp.dtype(compute_dtype).itemsize
    # 2x double-buffered input + 2x double-buffered output (input dtype), plus
    # ~3 live compute-dtype temporaries (x, exp/activation, out).
    bytes_per_row = cols * (4 * in_b + 3 * cd_b)
    tb = max(budget_bytes // max(bytes_per_row, 1), 1)
    # Cap a single input buffer at ~8 MiB: the measured roofline plateaus (~85%)
    # well below that, and it keeps the 64 MiB v7x budget safe.
    per_buf_cap_rows = max((8 << 20) // max(cols * in_b, 1), granularity)
    tb = min(tb, per_buf_cap_rows, 2048, rows)

    if tb >= rows:
        # Whole array fits in one grid step.  Only force a 2-way split on chips
        # with two TensorCores (v7x); on v5e/v6e extra steps are pure overhead.
        if dual_tc and rows >= 2 * granularity:
            half = -(-rows // 2)
            split = -(-half // granularity) * granularity
            if split < rows:
                return split
        return rows
    return max((tb // granularity) * granularity, granularity)


# --------------------------------- kernel ------------------------------------


def _prediction_kernel(*refs, task, use_bias, compute_dtype):
    """One (tb, F) tile: optional scalar bias add + task activation."""
    if use_bias:
        bias_ref, x_ref, o_ref = refs  # bias_ref: (1,) f32 in SMEM (scalar prefetch)
    else:
        x_ref, o_ref = refs

    x = x_ref[...].astype(compute_dtype)
    if use_bias:
        x = x + bias_ref[0].astype(compute_dtype)

    if task == "binary":
        out = jax.nn.sigmoid(x)                     # EUP-path transcendental
    elif task == "multiclass":
        # Per-row softmax.  A partial last tile may carry padded/garbage rows; the
        # max-subtraction keeps them finite and their stores are masked anyway.
        m = jnp.max(x, axis=-1, keepdims=True)      # XLU cross-lane reduce
        e = jnp.exp(x - m)
        denom = jnp.sum(e, axis=-1, keepdims=True)
        out = e / denom                             # exact: HBM-bound, EUP slack is free
    else:  # regression: identity (bias already applied)
        out = x
    o_ref[...] = out.astype(o_ref.dtype)


# -------------------------------- wrapper ------------------------------------


def prediction_layer(x, bias=None, *, task="binary", use_bias=False):
    """Pallas PredictionLayer. x: (..., F). bias: (1,) scalar (when use_bias)."""
    if task not in ("binary", "multiclass", "regression"):
        raise ValueError("task must be binary, multiclass or regression")

    # Identity head with no bias: skip the kernel (avoids a full HBM round trip).
    if task == "regression" and not use_bias:
        return x

    orig_shape = x.shape
    F = orig_shape[-1] if x.ndim >= 1 else 1
    B = max(x.size // max(F, 1), 1)
    # Collapsing leading dims keeps the minor dim — layout-preserving (no relayout).
    x2 = x.reshape(B, F)

    # Compute dtype: softmax math stays f32; elementwise stays in the input dtype
    # except bf16 on v5e (no bf16 VPU/EUP there) and non-float inputs.
    if task == "multiclass":
        compute_dtype = jnp.float32
    elif not jnp.issubdtype(x.dtype, jnp.floating):
        compute_dtype = jnp.float32
    elif x.dtype == jnp.bfloat16 and _is_v5e():
        compute_dtype = jnp.float32
    else:
        compute_dtype = x.dtype

    cap = _vmem_capacity_bytes()
    granularity = _sublane_granularity(x.dtype)
    dual_tc = _num_tensorcores() >= 2
    tb = _pick_row_tile(B, F, x.dtype, compute_dtype, cap // 2, granularity, dual_tc)
    grid = (pl.cdiv(B, tb),)

    kernel = functools.partial(
        _prediction_kernel, task=task, use_bias=use_bias, compute_dtype=compute_dtype
    )

    if use_bias:
        if bias is None:
            bias = jnp.zeros((1,), dtype=jnp.float32)  # matches torch.zeros((1,)) init
        bias = jnp.asarray(bias, dtype=jnp.float32).reshape((1,))
        # NOTE: scalar-bias-only path; a per-feature bias would need a VMEM operand.
        grid_spec = pltpu.PrefetchScalarGridSpec(
            num_scalar_prefetch=1,  # bias lands in SMEM before the grid runs
            grid=grid,
            in_specs=[pl.BlockSpec((tb, F), lambda i, b_ref: (i, 0))],
            out_specs=pl.BlockSpec((tb, F), lambda i, b_ref: (i, 0)),
        )
        args = (bias, x2)
    else:
        grid_spec = pltpu.PrefetchScalarGridSpec(
            num_scalar_prefetch=0,
            grid=grid,
            in_specs=[pl.BlockSpec((tb, F), lambda i: (i, 0))],
            out_specs=pl.BlockSpec((tb, F), lambda i: (i, 0)),
        )
        args = (x2,)

    out = pl.pallas_call(
        kernel,
        out_shape=jax.ShapeDtypeStruct((B, F), x.dtype),
        grid_spec=grid_spec,
        compiler_params=pltpu.CompilerParams(
            dimension_semantics=("parallel",),
            vmem_limit_bytes=int(cap * 3 // 4),
        ),
    )(*args)

    return out.reshape(orig_shape)


# ---------------------------------- test -------------------------------------

if __name__ == "__main__":
    key = jax.random.PRNGKey(0)
    B, F = 16, 32
    x = jax.random.normal(key, (B, F), dtype=jnp.float32)

    # nn.Parameter(torch.zeros((1,))) -> deterministic zero-init scalar bias.
    bias = jnp.zeros((1,), dtype=jnp.float32)

    # binary (with bias, use_bias=True path — exercises scalar prefetch)
    y_bin = prediction_layer(x, bias, task="binary", use_bias=True)
    jax.block_until_ready(y_bin)
    ref_bin = jax.nn.sigmoid(x + bias[0])
    assert jnp.allclose(y_bin, ref_bin, atol=1e-5, rtol=1e-5)

    # multiclass (softmax over last dim, default use_bias=False) — exact division
    y_mc = prediction_layer(x, task="multiclass", use_bias=False)
    jax.block_until_ready(y_mc)
    ref_mc = jax.nn.softmax(x, axis=-1)
    assert jnp.allclose(y_mc, ref_mc, atol=1e-6, rtol=1e-6)
    assert jnp.allclose(jnp.sum(y_mc, axis=-1), 1.0, atol=1e-6)

    # regression with non-zero bias (elementwise + scalar-prefetch bias path)
    bias_half = jnp.full((1,), 0.5, dtype=jnp.float32)
    y_regb = prediction_layer(x, bias_half, task="regression", use_bias=True)
    jax.block_until_ready(y_regb)
    assert jnp.allclose(y_regb, x + 0.5, atol=1e-6)

    # regression, no bias -> identity short-circuit (no kernel launch)
    y_reg = prediction_layer(x, task="regression", use_bias=False)
    jax.block_until_ready(y_reg)
    assert jnp.allclose(y_reg, x, atol=1e-6)

    print("KERNEL_OK")
</pallas_src>

<mosaic_0001>
module attributes {stable_mosaic.version = 11 : i64} {
  func.func @_prediction_kernel(%arg0: i32, %arg1: memref<1xf32, #tpu.memory_space<smem>>, %arg2: memref<16x32xf32, #tpu.memory_space<vmem>>, %arg3: memref<16x32xf32, #tpu.memory_space<vmem>>) attributes {dimension_semantics = [#tpu.dimension_semantics<parallel>], iteration_bounds = array<i64: 1>, scalar_prefetch = 1 : i64, scratch_operands = 0 : i64, tpu.core_type = #tpu.core_type<tc>, window_params = [{transform_indices = @transform_0, window_bounds = array<i64: 16, 32>}, {transform_indices = @transform_1, window_bounds = array<i64: 16, 32>}]} {
    %c0 = arith.constant 0 : index
    %c0_0 = arith.constant 0 : index
    %0 = vector.load %arg2[%c0, %c0_0] : memref<16x32xf32, #tpu.memory_space<vmem>>, vector<16x32xf32>
    %c0_1 = arith.constant 0 : index
    %1 = memref.load %arg1[%c0_1] : memref<1xf32, #tpu.memory_space<smem>>
    %2 = vector.broadcast %1 : f32 to vector<16x32xf32>
    %3 = arith.addf %0, %2 : vector<16x32xf32>
    %4 = arith.negf %3 : vector<16x32xf32>
    %5 = math.exp %4 : vector<16x32xf32>
    %cst = arith.constant 1.000000e+00 : f32
    %6 = vector.broadcast %cst : f32 to vector<16x32xf32>
    %7 = arith.addf %6, %5 : vector<16x32xf32>
    %8 = arith.divf %6, %7 : vector<16x32xf32>
    %c0_2 = arith.constant 0 : index
    %c0_3 = arith.constant 0 : index
    %9 = vector.load %arg3[%c0_2, %c0_3] : memref<16x32xf32, #tpu.memory_space<vmem>>, vector<16x32xf32>
    tpu.vector_store %arg3[%c0_2, %c0_3], %8 {strides = array<i32>} : memref<16x32xf32, #tpu.memory_space<vmem>>, vector<16x32xf32>,
    return
  }
  func.func @transform_0(%arg0: i32, %arg1: memref<1xf32, #tpu.memory_space<smem>>) -> (i32, i32) {
    %c0_i32 = arith.constant 0 : i32
    %c0_i32_0 = arith.constant 0 : i32
    return %arg0, %c0_i32 : i32, i32
  }
  func.func @transform_1(%arg0: i32, %arg1: memref<1xf32, #tpu.memory_space<smem>>) -> (i32, i32) {
    %c0_i32 = arith.constant 0 : i32
    %c0_i32_0 = arith.constant 0 : i32
    return %arg0, %c0_i32 : i32, i32
  }
}

</mosaic_0001>

<llo_original>
// kernel: tpu_custom_call.1
$region0: #{tpu_custom_call.1}
  #allocation0 [shape = 'u32[]', space=smem, size = 0x4, offset = 0x4, fixed_abs, tag = 'smem constant byte address 0x4 - core index']
  #allocation1 [shape = 'u32[144,128]{1,0:T(1,128)}', space=vmem, size = 0x12000, scoped, tag = 'internal scratch']
  #allocation2 [shape = 's32[1]{0}', space=sflag, size = 0x4, scoped, tag = 'scoped memory for tpu_custom_call.1']
  #allocation3 [shape = 'f32[1]{0:T(128)S(6)}', space=smem, size = 0x200, scoped, tag = 'prefetched SMEM operand 0']
  %s0 = inlined_call_operand.<no memory space> [shape: f32[1], index: 0, kind: input, shape index: {}]
  %s1 = inlined_call_operand.hbm [shape: f32[16,32], index: 1, kind: input, shape index: {}]
  %s2 = inlined_call_operand.hbm [shape: f32[16,32], index: 2, kind: output, shape index: {}]
  %s3 = sld [smem:[#allocation0]]
  $region18: #{tpu_custom_call.1} parent=0
    _
  %s5 = ssub.s32 1, %s3
  %s6 = scalar_select 0, %s5, %s3
  %7 = sst [smem:[#allocation3]] %s0
  $region1: #{tpu_custom_call.1} parent=0
    #allocation4 [shape = 'u8[8192]{0}', space=vmem, size = 0x2000, scoped, tag = 'input window, operand 1, single buffered']
    #allocation5 [shape = 's32[1]{0}', space=sflag, size = 0x4, scoped, tag = 'scoped memory for tpu_custom_call.1']
    #allocation6 [shape = 's32[1]{0}', space=sflag, size = 0x4, scoped, tag = 'scoped memory for tpu_custom_call.1']
    #allocation7 [shape = 'u8[8192]{0}', space=vmem, size = 0x2000, scoped, tag = 'output window, operand 0, single buffered']
    %8 = vsyncpa [#allocation5], 0
    %9 = vsyncpa [#allocation6], 0
    // Predicated region
    $region2: #{tpu_custom_call.1} parent=1 // pred_check
      _
    $region3: #{tpu_custom_call.1} parent=1 // pred_check_branch
      %11 = sbr.rel (0) target = $region5
    $region4: #{tpu_custom_call.1} parent=1 // pred_region
      %s13 = ssub.s32 256, 256
      %14 = vsyncadd [#allocation5], %s13
      %s15 = sshll.u32 [#allocation4], 4
      %s16 = int_to_ptr.vmem [resolvable:$true] %s15
      %21 = dma.hbm_to_vmem [thread:$0]  %s1, 256, %s16, [#allocation5], 128, 128, 8
    $region5: #{tpu_custom_call.1} parent=1 // pred_fallthru
      _
    // Predicated region
    $region6: #{tpu_custom_call.1} parent=1 // pred_check
      _
    $region7: #{tpu_custom_call.1} parent=1 // pred_check_branch
      %23 = sbr.rel (0) target = $region9
    $region8: #{tpu_custom_call.1} parent=1 // pred_region
      %24 = dma.done [#allocation5], 256
    $region9: #{tpu_custom_call.1} parent=1 // pred_fallthru
      _
    %v25 = vld [vmem:[#allocation4] sm:$0xff]
    %v26 = vld [vmem:[#allocation4 + $0x8] sm:$0xff]
    %s27 = sld [smem:[#allocation3]]
    %v28 = vstv %s27
    %v29 = vadd.f32 %v25, %v28
    %v30 = vadd.f32 %v26, %v28
    %v31 = vxor.u32 %v29, 2147483648
    %v32 = vxor.u32 %v30, 2147483648
    %v33 = vmul.f32 %v31, 1.442695
    %v34 = vpow.pop %v33
    %v35 = vmul.f32 %v32, 1.442695
    %v36 = vpow.pop %v35
    %v37 = vadd.f32 %v34, 1.0
    %v38 = vadd.f32 %v36, 1.0
    %v39 = vrcp.pop %v37
    %v40 = vmul.f32 1.0, %v39
    %v41 = vrcp.pop %v38
    %v42 = vmul.f32 1.0, %v41
    %vm43 = vcmask 261120
    %44 = vst.msk [vmem:[#allocation7] sm:$0xff] %vm43, %v40
    %45 = vst.msk [vmem:[#allocation7 + $0x8] sm:$0xff] %vm43, %v42
    // Predicated region
    $region10: #{tpu_custom_call.1} parent=1 // pred_check
      _
    $region11: #{tpu_custom_call.1} parent=1 // pred_check_branch
      %47 = sbr.rel (0) target = $region13
    $region12: #{tpu_custom_call.1} parent=1 // pred_region
      %s49 = ssub.s32 256, 256
      %50 = vsyncadd [#allocation6], %s49
      %s51 = sshll.u32 [#allocation7], 4
      %s52 = int_to_ptr.vmem [resolvable:$true] %s51
      %57 = dma.vmem_to_hbm [thread:$0]  %s52, 256, %s2, [#allocation6], 128, 128, 8
    $region13: #{tpu_custom_call.1} parent=1 // pred_fallthru
      _
    // Predicated region
    $region14: #{tpu_custom_call.1} parent=1 // pred_check
      _
    $region15: #{tpu_custom_call.1} parent=1 // pred_check_branch
      %59 = sbr.rel (0) target = $region17
    $region16: #{tpu_custom_call.1} parent=1 // pred_region
      %60 = dma.done [#allocation6], 256
    $region17: #{tpu_custom_call.1} parent=1 // pred_fallthru
      _
    %61 = vsyncpa [#allocation5], 1
    %62 = vsyncpa [#allocation6], 1

</llo_original>
